<compile_context>
chip_gen: v5e
topology: v5e:2x2
jax: 0.10.0
libtpu: 0.0.40
codegen_flags: <defaults>
</compile_context>

<pallas_src>
import jax
import jax.numpy as jnp
from jax.experimental import pallas as pl
from jax.experimental.pallas import tpu as pltpu


# ------------------------------ Pallas kernel --------------------------------

def _copy_kernel(x_ref, o_ref):
    # Straight tile copy: Pallas pipelines the HBM<->VMEM DMAs around this.
    o_ref[...] = x_ref[...]


# ~2 MiB per block: 4x (in + out, double-buffered) = ~8 MiB resident, which
# fits every generation's default scoped VMEM (v5e 16 MiB is the tightest)
# while already sitting near the HBM-roofline sweet spot for a tiled copy.
_TARGET_BLOCK_BYTES = 2 * 1024 * 1024


def _tiled_copy(x2, block, grid, index_map, total_bytes):
    return pl.pallas_call(
        _copy_kernel,
        out_shape=jax.ShapeDtypeStruct(x2.shape, x2.dtype),
        grid=grid,
        in_specs=[pl.BlockSpec(block, index_map)],
        out_specs=pl.BlockSpec(block, index_map),
        compiler_params=pltpu.CompilerParams(
            dimension_semantics=("parallel",),
        ),
        cost_estimate=pl.CostEstimate(
            flops=0, transcendentals=0, bytes_accessed=2 * total_bytes),
    )(x2)


# -------------------------------- wrapper ------------------------------------

def direct_fwd_pallas(x):
    """Identity forward of DirectFwd, routed through a single Pallas kernel."""
    orig_shape = x.shape
    total = x.size
    if total == 0:
        # Nothing to move; identity of an empty array is the array itself.
        return x

    itemsize = jnp.dtype(x.dtype).itemsize
    total_bytes = total * itemsize
    xf = x.reshape(-1)  # contiguous flatten: pure relabeling, no data movement

    if total % 128 == 0:
        # Main path: lane-dense 2-D view.  Pick the widest multiple-of-128
        # last dim that still leaves >= 8 rows (sublane-dense vregs too).
        divisors = [c for c in (2048, 1024, 512, 256, 128) if total % c == 0]
        good = [c for c in divisors if total // c >= 8]
        N2 = good[0] if good else divisors[-1]
        M2 = total // N2
        x2 = xf.reshape(M2, N2)

        # Rows per block sized by bytes (multiple of 8 for the sublane rule).
        tm = max(1, _TARGET_BLOCK_BYTES // (N2 * itemsize))
        tm = max(8, (tm // 8) * 8)
        if tm >= M2:
            if M2 >= 16:
                # Split into >= 2 parallel blocks so both v7x TensorCores work.
                tm = max(8, ((M2 // 2) // 8) * 8)
            else:
                tm = M2  # single full-extent block (no (8,128) constraint)

        grid = (pl.cdiv(M2, tm),)  # partial last block is masked by Pallas
        out = _tiled_copy(x2, (tm, N2), grid, lambda i: (i, 0), total_bytes)
    else:
        # Rare fallback (element count not a multiple of 128): single row,
        # tile along the lane dim; Pallas masks the ragged tail block.
        x2 = xf.reshape(1, total)
        if total_bytes <= _TARGET_BLOCK_BYTES:
            tn = total  # full-extent single block
        else:
            tn = max(128, ((_TARGET_BLOCK_BYTES // itemsize) // 128) * 128)
        grid = (pl.cdiv(total, tn),)
        out = _tiled_copy(x2, (1, tn), grid, lambda i: (0, i), total_bytes)

    return out.reshape(orig_shape)


# ---------------------------------- main --------------------------------------

if __name__ == "__main__":
    key = jax.random.PRNGKey(0)
    x = jax.random.normal(key, (2, 4, 16, 16), dtype=jnp.float32)

    fwd = jax.jit(direct_fwd_pallas)
    y = fwd(x)
    jax.block_until_ready(y)

    assert y.shape == x.shape and y.dtype == x.dtype
    assert bool(jnp.all(y == x))
    print("KERNEL_OK")
</pallas_src>

<mosaic_0001>
module attributes {stable_mosaic.version = 11 : i64} {
  func.func @_copy_kernel(%arg0: i32, %arg1: memref<8x256xf32, #tpu.memory_space<vmem>>, %arg2: memref<8x256xf32, #tpu.memory_space<vmem>>) attributes {dimension_semantics = [#tpu.dimension_semantics<parallel>], iteration_bounds = array<i64: 1>, scalar_prefetch = 0 : i64, scratch_operands = 0 : i64, tpu.core_type = #tpu.core_type<tc>, window_params = [{transform_indices = @transform_0, window_bounds = array<i64: 8, 256>}, {transform_indices = @transform_1, window_bounds = array<i64: 8, 256>}]} {
    %c0 = arith.constant 0 : index
    %c0_0 = arith.constant 0 : index
    %0 = vector.load %arg1[%c0, %c0_0] : memref<8x256xf32, #tpu.memory_space<vmem>>, vector<8x256xf32>
    %c0_1 = arith.constant 0 : index
    %c0_2 = arith.constant 0 : index
    %1 = vector.load %arg2[%c0_1, %c0_2] : memref<8x256xf32, #tpu.memory_space<vmem>>, vector<8x256xf32>
    tpu.vector_store %arg2[%c0_1, %c0_2], %0 {strides = array<i32>} : memref<8x256xf32, #tpu.memory_space<vmem>>, vector<8x256xf32>,
    return
  }
  func.func @transform_0(%arg0: i32) -> (i32, i32) {
    %c0_i32 = arith.constant 0 : i32
    %c0_i32_0 = arith.constant 0 : i32
    return %arg0, %c0_i32 : i32, i32
  }
  func.func @transform_1(%arg0: i32) -> (i32, i32) {
    %c0_i32 = arith.constant 0 : i32
    %c0_i32_0 = arith.constant 0 : i32
    return %arg0, %c0_i32 : i32, i32
  }
}

</mosaic_0001>

<llo_original>
// kernel: direct_fwd_pallas.1
$region0: #{direct_fwd_pallas.1}
  #allocation0 [shape = 'u32[]', space=smem, size = 0x4, offset = 0x4, fixed_abs, tag = 'smem constant byte address 0x4 - core index']
  #allocation1 [shape = 'u32[72,128]{1,0:T(1,128)}', space=vmem, size = 0x9000, scoped, tag = 'internal scratch']
  %s0 = inlined_call_operand.vmem [shape: f32[8,256], index: 0, kind: input, shape index: {}]
  %s1 = inlined_call_operand.vmem [shape: f32[8,256], index: 1, kind: output, shape index: {}]
  %s2 = sld [smem:[#allocation0]]
  $region14: #{direct_fwd_pallas.1} parent=0
    _
  %s4 = ssub.s32 1, %s2
  %s5 = scalar_select 0, %s4, %s2
  // Predicated region
  $region2: #{direct_fwd_pallas.1} parent=0 // pred_check
    _
  $region3: #{direct_fwd_pallas.1} parent=0 // pred_check_branch
    %7 = sbr.rel (0) target = $region5
  $region4: #{direct_fwd_pallas.1} parent=0 // pred_region
    _
  $region5: #{direct_fwd_pallas.1} parent=0 // pred_fallthru
    _
  %v8 = vld [vmem:[%s0] sm:$0xff]
  %v9 = vld [vmem:[%s0 + $0x8] sm:$0xff]
  %10 = vst [vmem:[%s1] sm:$0xff] %v8
  %11 = vst [vmem:[%s1 + $0x8] sm:$0xff] %v9
  // Predicated region
  $region6: #{direct_fwd_pallas.1} parent=0 // pred_check
    _
  $region7: #{direct_fwd_pallas.1} parent=0 // pred_check_branch
    %13 = sbr.rel (0) target = $region9
  $region8: #{direct_fwd_pallas.1} parent=0 // pred_region
    _
  $region9: #{direct_fwd_pallas.1} parent=0 // pred_fallthru
    _
  // Predicated region
  $region10: #{direct_fwd_pallas.1} parent=0 // pred_check
    _
  $region11: #{direct_fwd_pallas.1} parent=0 // pred_check_branch
    %15 = sbr.rel (0) target = $region13
  $region12: #{direct_fwd_pallas.1} parent=0 // pred_region
    _
  $region13: #{direct_fwd_pallas.1} parent=0 // pred_fallthru
    _

</llo_original>
